<compile_context>
chip_gen: v7x
topology: tpu7x:2x2x1
jax: 0.10.0
libtpu: 0.0.40
codegen_flags: <defaults>
</compile_context>

<pallas_src>
import functools

import jax
import jax.numpy as jnp
import numpy as np
from jax import lax
from jax.experimental import pallas as pl
from jax.experimental.pallas import tpu as pltpu

_MXU_PRECISION = lax.Precision.DEFAULT  # single-pass bf16 MXU (v6e/v7x item)


def _round_up(x, m):
    return ((x + m - 1) // m) * m


def qa_rnn_kernel(ids_ref, emb_proj_ref, w_hh_t_ref,
                  w_lin_q_ref, w_lin_a_ref, b_lin_ref, out_ref,
                  *, PT, R, T):
    """One pair-tile per grid step.

    ids_ref      : (T*R, 1) int32  time-major stacked token ids for this tile
                   (within each timestep block of R rows: rows [0,PT) are q,
                    rows [PT,2PT) are a, for the same PT pairs)
    emb_proj_ref : (V, H)  embedding table with W_ih and (b_ih+b_hh) folded in
    w_hh_t_ref   : (H, H)  hidden-to-hidden weight, pre-transposed
    w_lin_q_ref  : (H, 2)  classifier weight, q half, pre-transposed
    w_lin_a_ref  : (H, 2)  classifier weight, a half, pre-transposed
    b_lin_ref    : (1, 2)
    out_ref      : (PT, 2) log-probabilities for this tile's pairs
    """
    V = emb_proj_ref.shape[0]
    TR = T * R

    # Fused embedding gather as a one-hot MXU dot.  W_ih and the RNN bias are
    # already folded into emb_proj (exact: each one-hot row sums to 1).
    ids = ids_ref[...]                                               # (TR, 1)
    token_iota = lax.broadcasted_iota(jnp.int32, (TR, V), 1)
    onehot = (token_iota == ids).astype(jnp.float32)                 # (TR, V)
    x_all = jnp.dot(onehot, emb_proj_ref[...],
                    preferred_element_type=jnp.float32,
                    precision=_MXU_PRECISION)                        # (TR, H)

    w_hh_t = w_hh_t_ref[...]                                         # (H, H)

    # Single merged recurrence over T steps; h and the max-pool accumulator
    # live in registers (static unrolled loop).  h_{-1}=0 so the t=0 h@W_hh
    # term vanishes; bias is already inside x_all.
    h = jnp.tanh(x_all[0:R, :])                                      # (R, H)
    pool = h
    for t in range(1, T):
        x_t = x_all[t * R:(t + 1) * R, :]
        h = jnp.tanh(x_t + jnp.dot(h, w_hh_t,
                                   preferred_element_type=jnp.float32,
                                   precision=_MXU_PRECISION))
        pool = jnp.maximum(pool, h)                                  # max, dim=1

    # torch.cat((q, a), dim=1) -> Linear(2H, 2) as split dots (no lane concat).
    # Dropout is identity in eval mode.
    q_pool = pool[:PT, :]                                            # (PT, H)
    a_pool = pool[PT:2 * PT, :]                                      # (PT, H)
    logits = (jnp.dot(q_pool, w_lin_q_ref[...],
                      preferred_element_type=jnp.float32,
                      precision=_MXU_PRECISION)
              + jnp.dot(a_pool, w_lin_a_ref[...],
                        preferred_element_type=jnp.float32,
                        precision=_MXU_PRECISION)
              + b_lin_ref[...])                                      # (PT, 2)

    # LogSoftmax(dim=1)
    m = jnp.max(logits, axis=1, keepdims=True)
    z = logits - m
    lse = jnp.log(jnp.sum(jnp.exp(z), axis=1, keepdims=True))
    out_ref[...] = z - lse


def prepare_params(params):
    """One-time weight prep, hoisted out of the per-call jitted path."""
    emb = params["emb"].astype(jnp.float32)           # (V, E)
    w_ih = params["w_ih"].astype(jnp.float32)         # (H, E)
    w_hh = params["w_hh"].astype(jnp.float32)         # (H, H)
    b = (params["b_ih"] + params["b_hh"]).astype(jnp.float32)  # (H,)
    w_lin = params["w_lin"].astype(jnp.float32)       # (2, 2H)
    b_lin = params["b_lin"].astype(jnp.float32)       # (2,)
    H = w_hh.shape[0]
    # Fold W_ih AND the bias into the embedding table (exact: one-hot rows
    # sum to 1, so onehot @ (emb @ W_ih^T + b) == x_proj + b).
    emb_proj = emb @ w_ih.T + b[None, :]              # (V, H)
    return {
        "emb_proj": emb_proj,
        "w_hh_t": w_hh.T,                             # (H, H)
        "w_lin_q": w_lin[:, :H].T,                    # (H, 2)
        "w_lin_a": w_lin[:, H:].T,                    # (H, 2)
        "b_lin": b_lin.reshape(1, 2),                 # (1, 2)
    }


def qa_rnn_forward(q_ids, a_ids, prepared):
    B, T = q_ids.shape
    V, H = prepared["emb_proj"].shape

    # Pair tiling: PT pairs per tile (multiple of 8 sublanes, up to 64);
    # one grid step per tile so large batches shard across v7x's 2 TCs.
    MAX_PAIRS_PER_TILE = 64
    PT = min(MAX_PAIRS_PER_TILE, _round_up(B, 8))
    n_tiles = -(-B // PT)
    B_pad = n_tiles * PT
    R = 2 * PT                      # rows per tile (q pairs then a pairs)

    # Glue: pad pairs with token 0 (results sliced off), stack q/a per tile,
    # flatten time-major within each tile.
    q_pad = jnp.pad(q_ids.astype(jnp.int32), ((0, B_pad - B), (0, 0)))
    a_pad = jnp.pad(a_ids.astype(jnp.int32), ((0, B_pad - B), (0, 0)))
    q_t = q_pad.reshape(n_tiles, PT, T)
    a_t = a_pad.reshape(n_tiles, PT, T)
    stacked = jnp.concatenate([q_t, a_t], axis=1)          # (n_tiles, R, T)
    ids_tm = jnp.transpose(stacked, (0, 2, 1)).reshape(n_tiles * T * R, 1)

    kernel = functools.partial(qa_rnn_kernel, PT=PT, R=R, T=T)
    pinned = lambda i: (0, 0)       # weights resident across the whole grid
    out = pl.pallas_call(
        kernel,
        out_shape=jax.ShapeDtypeStruct((n_tiles * PT, 2), jnp.float32),
        grid=(n_tiles,),
        in_specs=[
            pl.BlockSpec((T * R, 1), lambda i: (i, 0)),     # ids per tile
            pl.BlockSpec((V, H), pinned),                   # emb_proj
            pl.BlockSpec((H, H), pinned),                   # w_hh_t
            pl.BlockSpec((H, 2), pinned),                   # w_lin_q
            pl.BlockSpec((H, 2), pinned),                   # w_lin_a
            pl.BlockSpec((1, 2), pinned),                   # b_lin
        ],
        out_specs=pl.BlockSpec((PT, 2), lambda i: (i, 0)),
        compiler_params=pltpu.CompilerParams(
            dimension_semantics=("parallel",)),
    )(ids_tm, prepared["emb_proj"], prepared["w_hh_t"],
      prepared["w_lin_q"], prepared["w_lin_a"], prepared["b_lin"])

    return out[:B, :]


def reference_forward(q_ids, a_ids, params):
    """Pure-JAX reference mirroring the PyTorch module (eval mode)."""
    emb, w_ih, w_hh = params["emb"], params["w_ih"], params["w_hh"]
    b_ih, b_hh = params["b_ih"], params["b_hh"]
    w_lin, b_lin = params["w_lin"], params["b_lin"]
    H = w_hh.shape[0]

    def rnn(x):  # x: (B, T, E) -> outputs (B, T, H)
        def step(h, x_t):
            h = jnp.tanh(x_t @ w_ih.T + b_ih + h @ w_hh.T + b_hh)
            return h, h
        h0 = jnp.zeros((x.shape[0], H), jnp.float32)
        _, hs = lax.scan(step, h0, jnp.transpose(x, (1, 0, 2)))
        return jnp.transpose(hs, (1, 0, 2))

    q_o = rnn(emb[q_ids].astype(jnp.float32))
    a_o = rnn(emb[a_ids].astype(jnp.float32))
    qp = jnp.max(q_o, axis=1)                # max_pool, dim=1
    ap = jnp.max(a_o, axis=1)
    x = jnp.concatenate([qp, ap], axis=1)    # (B, 2H)
    logits = x @ w_lin.T + b_lin             # Dropout in eval = identity
    return jax.nn.log_softmax(logits, axis=1)


def init_params(key, vocab_size, embedding_dim, hidden_size):
    ks = jax.random.split(key, 7)
    s = 1.0 / np.sqrt(hidden_size)
    return {
        "emb":   jax.random.normal(ks[0], (vocab_size, embedding_dim),
                                   jnp.float32),
        "w_ih":  jax.random.uniform(ks[1], (hidden_size, embedding_dim),
                                    jnp.float32, -s, s),
        "w_hh":  jax.random.uniform(ks[2], (hidden_size, hidden_size),
                                    jnp.float32, -s, s),
        "b_ih":  jax.random.uniform(ks[3], (hidden_size,), jnp.float32, -s, s),
        "b_hh":  jax.random.uniform(ks[4], (hidden_size,), jnp.float32, -s, s),
        "w_lin": jax.random.uniform(ks[5], (2, 2 * hidden_size),
                                    jnp.float32, -s, s),
        "b_lin": jax.random.uniform(ks[6], (2,), jnp.float32, -s, s),
    }


if __name__ == "__main__":
    # Small shapes: batch=2, seq=8, vocab=50, embedding_dim=16, hidden=32,
    # n_layers=1, is_bi=False, mode='max'.
    B, T, V, E, H = 2, 8, 50, 16, 32

    key = jax.random.PRNGKey(0)
    k_param, k_q, k_a = jax.random.split(key, 3)
    params = init_params(k_param, V, E, H)
    q_ids = jax.random.randint(k_q, (B, T), 0, V, dtype=jnp.int32)
    a_ids = jax.random.randint(k_a, (B, T), 0, V, dtype=jnp.int32)

    prepared = prepare_params(params)       # one-time hoisted weight prep
    fwd = jax.jit(qa_rnn_forward)
    out = jax.block_until_ready(fwd(q_ids, a_ids, prepared))

    ref = jax.block_until_ready(reference_forward(q_ids, a_ids, params))
    np.testing.assert_allclose(np.asarray(out), np.asarray(ref),
                               atol=1e-3, rtol=1e-3)

    assert out.shape == (B, 2)
    print("KERNEL_OK")
</pallas_src>

<mosaic_0001>
module attributes {stable_mosaic.version = 11 : i64} {
  func.func @qa_rnn_kernel(%arg0: i32, %arg1: memref<128x1xi32, #tpu.memory_space<vmem>>, %arg2: memref<50x32xf32, #tpu.memory_space<vmem>>, %arg3: memref<32x32xf32, #tpu.memory_space<vmem>>, %arg4: memref<32x2xf32, #tpu.memory_space<vmem>>, %arg5: memref<32x2xf32, #tpu.memory_space<vmem>>, %arg6: memref<1x2xf32, #tpu.memory_space<vmem>>, %arg7: memref<8x2xf32, #tpu.memory_space<vmem>>) attributes {dimension_semantics = [#tpu.dimension_semantics<parallel>], iteration_bounds = array<i64: 1>, scalar_prefetch = 0 : i64, scratch_operands = 0 : i64, tpu.core_type = #tpu.core_type<tc>, window_params = [{transform_indices = @transform_0, window_bounds = array<i64: 128, 1>}, {pipeline_mode = #tpu.pipeline_mode<synchronous>, transform_indices = @transform_1, window_bounds = array<i64: 50, 32>}, {pipeline_mode = #tpu.pipeline_mode<synchronous>, transform_indices = @transform_2, window_bounds = array<i64: 32, 32>}, {pipeline_mode = #tpu.pipeline_mode<synchronous>, transform_indices = @transform_3, window_bounds = array<i64: 32, 2>}, {pipeline_mode = #tpu.pipeline_mode<synchronous>, transform_indices = @transform_4, window_bounds = array<i64: 32, 2>}, {pipeline_mode = #tpu.pipeline_mode<synchronous>, transform_indices = @transform_5, window_bounds = array<i64: 1, 2>}, {transform_indices = @transform_6, window_bounds = array<i64: 8, 2>}]} {
    %c0 = arith.constant 0 : index
    %c0_0 = arith.constant 0 : index
    %0 = vector.load %arg1[%c0, %c0_0] : memref<128x1xi32, #tpu.memory_space<vmem>>, vector<128x1xi32>
    %1 = tpu.iota {dimensions = array<i32: 1>} : vector<128x50xi32>
    %2 = vector.broadcast %0 : vector<128x1xi32> to vector<128x50xi32>
    %3 = arith.cmpi eq, %1, %2 : vector<128x50xi32>
    %4 = arith.extui %3 : vector<128x50xi1> to vector<128x50xi32>
    %5 = arith.sitofp %4 : vector<128x50xi32> to vector<128x50xf32>
    %c0_1 = arith.constant 0 : index
    %c0_2 = arith.constant 0 : index
    %6 = vector.load %arg2[%c0_1, %c0_2] : memref<50x32xf32, #tpu.memory_space<vmem>>, vector<50x32xf32>
    %cst = arith.constant dense<0.000000e+00> : vector<128x32xf32>
    %7 = tpu.matmul %5, %6, %cst {dimension_numbers = #tpu.dot_dimension_numbers<[1], [0], [0], [1], [0, 0, 1, 1], [], []>} : vector<128x50xf32>, vector<50x32xf32>, vector<128x32xf32> -> vector<128x32xf32>
    %c0_3 = arith.constant 0 : index
    %c0_4 = arith.constant 0 : index
    %8 = vector.load %arg3[%c0_3, %c0_4] : memref<32x32xf32, #tpu.memory_space<vmem>>, vector<32x32xf32>
    %9 = vector.extract_strided_slice %7 {offsets = [0, 0], sizes = [16, 32], strides = [1, 1]} : vector<128x32xf32> to vector<16x32xf32>
    %10 = math.tanh %9 : vector<16x32xf32>
    %11 = vector.extract_strided_slice %7 {offsets = [16, 0], sizes = [16, 32], strides = [1, 1]} : vector<128x32xf32> to vector<16x32xf32>
    %cst_5 = arith.constant dense<0.000000e+00> : vector<16x32xf32>
    %12 = tpu.matmul %10, %8, %cst_5 {dimension_numbers = #tpu.dot_dimension_numbers<[1], [0], [0], [1], [0, 0, 1, 1], [], []>} : vector<16x32xf32>, vector<32x32xf32>, vector<16x32xf32> -> vector<16x32xf32>
    %13 = arith.addf %11, %12 : vector<16x32xf32>
    %14 = math.tanh %13 : vector<16x32xf32>
    %15 = arith.maximumf %10, %14 : vector<16x32xf32>
    %16 = vector.extract_strided_slice %7 {offsets = [32, 0], sizes = [16, 32], strides = [1, 1]} : vector<128x32xf32> to vector<16x32xf32>
    %cst_6 = arith.constant dense<0.000000e+00> : vector<16x32xf32>
    %17 = tpu.matmul %14, %8, %cst_6 {dimension_numbers = #tpu.dot_dimension_numbers<[1], [0], [0], [1], [0, 0, 1, 1], [], []>} : vector<16x32xf32>, vector<32x32xf32>, vector<16x32xf32> -> vector<16x32xf32>
    %18 = arith.addf %16, %17 : vector<16x32xf32>
    %19 = math.tanh %18 : vector<16x32xf32>
    %20 = arith.maximumf %15, %19 : vector<16x32xf32>
    %21 = vector.extract_strided_slice %7 {offsets = [48, 0], sizes = [16, 32], strides = [1, 1]} : vector<128x32xf32> to vector<16x32xf32>
    %cst_7 = arith.constant dense<0.000000e+00> : vector<16x32xf32>
    %22 = tpu.matmul %19, %8, %cst_7 {dimension_numbers = #tpu.dot_dimension_numbers<[1], [0], [0], [1], [0, 0, 1, 1], [], []>} : vector<16x32xf32>, vector<32x32xf32>, vector<16x32xf32> -> vector<16x32xf32>
    %23 = arith.addf %21, %22 : vector<16x32xf32>
    %24 = math.tanh %23 : vector<16x32xf32>
    %25 = arith.maximumf %20, %24 : vector<16x32xf32>
    %26 = vector.extract_strided_slice %7 {offsets = [64, 0], sizes = [16, 32], strides = [1, 1]} : vector<128x32xf32> to vector<16x32xf32>
    %cst_8 = arith.constant dense<0.000000e+00> : vector<16x32xf32>
    %27 = tpu.matmul %24, %8, %cst_8 {dimension_numbers = #tpu.dot_dimension_numbers<[1], [0], [0], [1], [0, 0, 1, 1], [], []>} : vector<16x32xf32>, vector<32x32xf32>, vector<16x32xf32> -> vector<16x32xf32>
    %28 = arith.addf %26, %27 : vector<16x32xf32>
    %29 = math.tanh %28 : vector<16x32xf32>
    %30 = arith.maximumf %25, %29 : vector<16x32xf32>
    %31 = vector.extract_strided_slice %7 {offsets = [80, 0], sizes = [16, 32], strides = [1, 1]} : vector<128x32xf32> to vector<16x32xf32>
    %cst_9 = arith.constant dense<0.000000e+00> : vector<16x32xf32>
    %32 = tpu.matmul %29, %8, %cst_9 {dimension_numbers = #tpu.dot_dimension_numbers<[1], [0], [0], [1], [0, 0, 1, 1], [], []>} : vector<16x32xf32>, vector<32x32xf32>, vector<16x32xf32> -> vector<16x32xf32>
    %33 = arith.addf %31, %32 : vector<16x32xf32>
    %34 = math.tanh %33 : vector<16x32xf32>
    %35 = arith.maximumf %30, %34 : vector<16x32xf32>
    %36 = vector.extract_strided_slice %7 {offsets = [96, 0], sizes = [16, 32], strides = [1, 1]} : vector<128x32xf32> to vector<16x32xf32>
    %cst_10 = arith.constant dense<0.000000e+00> : vector<16x32xf32>
    %37 = tpu.matmul %34, %8, %cst_10 {dimension_numbers = #tpu.dot_dimension_numbers<[1], [0], [0], [1], [0, 0, 1, 1], [], []>} : vector<16x32xf32>, vector<32x32xf32>, vector<16x32xf32> -> vector<16x32xf32>
    %38 = arith.addf %36, %37 : vector<16x32xf32>
    %39 = math.tanh %38 : vector<16x32xf32>
    %40 = arith.maximumf %35, %39 : vector<16x32xf32>
    %41 = vector.extract_strided_slice %7 {offsets = [112, 0], sizes = [16, 32], strides = [1, 1]} : vector<128x32xf32> to vector<16x32xf32>
    %cst_11 = arith.constant dense<0.000000e+00> : vector<16x32xf32>
    %42 = tpu.matmul %39, %8, %cst_11 {dimension_numbers = #tpu.dot_dimension_numbers<[1], [0], [0], [1], [0, 0, 1, 1], [], []>} : vector<16x32xf32>, vector<32x32xf32>, vector<16x32xf32> -> vector<16x32xf32>
    %43 = arith.addf %41, %42 : vector<16x32xf32>
    %44 = math.tanh %43 : vector<16x32xf32>
    %45 = arith.maximumf %40, %44 : vector<16x32xf32>
    %46 = vector.extract_strided_slice %45 {offsets = [0, 0], sizes = [8, 32], strides = [1, 1]} : vector<16x32xf32> to vector<8x32xf32>
    %47 = vector.extract_strided_slice %45 {offsets = [8, 0], sizes = [8, 32], strides = [1, 1]} : vector<16x32xf32> to vector<8x32xf32>
    %c0_12 = arith.constant 0 : index
    %c0_13 = arith.constant 0 : index
    %48 = vector.load %arg4[%c0_12, %c0_13] : memref<32x2xf32, #tpu.memory_space<vmem>>, vector<32x2xf32>
    %cst_14 = arith.constant dense<0.000000e+00> : vector<8x2xf32>
    %49 = tpu.matmul %46, %48, %cst_14 {dimension_numbers = #tpu.dot_dimension_numbers<[1], [0], [0], [1], [0, 0, 1, 1], [], []>} : vector<8x32xf32>, vector<32x2xf32>, vector<8x2xf32> -> vector<8x2xf32>
    %c0_15 = arith.constant 0 : index
    %c0_16 = arith.constant 0 : index
    %50 = vector.load %arg5[%c0_15, %c0_16] : memref<32x2xf32, #tpu.memory_space<vmem>>, vector<32x2xf32>
    %cst_17 = arith.constant dense<0.000000e+00> : vector<8x2xf32>
    %51 = tpu.matmul %47, %50, %cst_17 {dimension_numbers = #tpu.dot_dimension_numbers<[1], [0], [0], [1], [0, 0, 1, 1], [], []>} : vector<8x32xf32>, vector<32x2xf32>, vector<8x2xf32> -> vector<8x2xf32>
    %52 = arith.addf %49, %51 : vector<8x2xf32>
    %c0_18 = arith.constant 0 : index
    %c0_19 = arith.constant 0 : index
    %53 = vector.load %arg6[%c0_18, %c0_19] : memref<1x2xf32, #tpu.memory_space<vmem>>, vector<1x2xf32>
    %54 = vector.broadcast %53 : vector<1x2xf32> to vector<8x2xf32>
    %55 = arith.addf %52, %54 : vector<8x2xf32>
    %cst_20 = arith.constant dense<0xFF800000> : vector<8xf32>
    %56 = vector.multi_reduction <maximumf>, %55, %cst_20 [1] : vector<8x2xf32> to vector<8xf32>
    %57 = vector.shape_cast %56 : vector<8xf32> to vector<8x1xf32>
    %58 = vector.broadcast %57 : vector<8x1xf32> to vector<8x2xf32>
    %59 = arith.subf %55, %58 : vector<8x2xf32>
    %60 = math.exp %59 : vector<8x2xf32>
    %cst_21 = arith.constant dense<0.000000e+00> : vector<8xf32>
    %61 = vector.multi_reduction <add>, %60, %cst_21 [1] : vector<8x2xf32> to vector<8xf32>
    %62 = vector.shape_cast %61 : vector<8xf32> to vector<8x1xf32>
    %63 = math.log %62 : vector<8x1xf32>
    %64 = vector.broadcast %63 : vector<8x1xf32> to vector<8x2xf32>
    %65 = arith.subf %59, %64 : vector<8x2xf32>
    %c0_22 = arith.constant 0 : index
    %c0_23 = arith.constant 0 : index
    %66 = vector.load %arg7[%c0_22, %c0_23] : memref<8x2xf32, #tpu.memory_space<vmem>>, vector<8x2xf32>
    tpu.vector_store %arg7[%c0_22, %c0_23], %65 {strides = array<i32>} : memref<8x2xf32, #tpu.memory_space<vmem>>, vector<8x2xf32>,
    return
  }
  func.func @transform_0(%arg0: i32) -> (i32, i32) {
    %c0_i32 = arith.constant 0 : i32
    %c0_i32_0 = arith.constant 0 : i32
    return %arg0, %c0_i32 : i32, i32
  }
  func.func @transform_1(%arg0: i32) -> (i32, i32) {
    %c0_i32 = arith.constant 0 : i32
    %c0_i32_0 = arith.constant 0 : i32
    %c0_i32_1 = arith.constant 0 : i32
    return %c0_i32, %c0_i32_0 : i32, i32
  }
  func.func @transform_2(%arg0: i32) -> (i32, i32) {
    %c0_i32 = arith.constant 0 : i32
    %c0_i32_0 = arith.constant 0 : i32
    %c0_i32_1 = arith.constant 0 : i32
    return %c0_i32, %c0_i32_0 : i32, i32
  }
  func.func @transform_3(%arg0: i32) -> (i32, i32) {
    %c0_i32 = arith.constant 0 : i32
    %c0_i32_0 = arith.constant 0 : i32
    %c0_i32_1 = arith.constant 0 : i32
    return %c0_i32, %c0_i32_0 : i32, i32
  }
  func.func @transform_4(%arg0: i32) -> (i32, i32) {
    %c0_i32 = arith.constant 0 : i32
    %c0_i32_0 = arith.constant 0 : i32
    %c0_i32_1 = arith.constant 0 : i32
    return %c0_i32, %c0_i32_0 : i32, i32
  }
  func.func @transform_5(%arg0: i32) -> (i32, i32) {
    %c0_i32 = arith.constant 0 : i32
    %c0_i32_0 = arith.constant 0 : i32
    %c0_i32_1 = arith.constant 0 : i32
    return %c0_i32, %c0_i32_0 : i32, i32
  }
  func.func @transform_6(%arg0: i32) -> (i32, i32) {
    %c0_i32 = arith.constant 0 : i32
    %c0_i32_0 = arith.constant 0 : i32
    return %arg0, %c0_i32 : i32, i32
  }
}

</mosaic_0001>

<llo_original>
// kernel: qa_rnn_forward.1
$region0: #{qa_rnn_forward.1}
  #allocation0 [shape = 'u32[]', space=smem, size = 0x4, offset = 0x4, fixed_abs, tag = 'smem constant byte address 0x4 - core index']
  #allocation1 [shape = 'u32[144,128]{1,0:T(1,128)}', space=vmem, size = 0x12000, scoped, tag = 'internal scratch']
  %s0 = inlined_call_operand.vmem [shape: s32[128,1], index: 0, kind: input, shape index: {}]
  %s1 = inlined_call_operand.vmem [shape: f32[50,32], index: 1, kind: input, shape index: {}]
  %s2 = inlined_call_operand.vmem [shape: f32[32,32], index: 2, kind: input, shape index: {}]
  %s3 = inlined_call_operand.vmem [shape: f32[32,2], index: 3, kind: input, shape index: {}]
  %s4 = inlined_call_operand.vmem [shape: f32[32,2], index: 4, kind: input, shape index: {}]
  %s5 = inlined_call_operand.vmem [shape: f32[1,2], index: 5, kind: input, shape index: {}]
  %s6 = inlined_call_operand.vmem [shape: f32[8,2], index: 6, kind: output, shape index: {}]
  %s7 = sld [smem:[#allocation0]]
  $region34: #{qa_rnn_forward.1} parent=0
    _
  %s9 = ssub.s32 1, %s7
  %s10 = scalar_select 0, %s9, %s7
  // Predicated region
  $region2: #{qa_rnn_forward.1} parent=0 // pred_check
    _
  $region3: #{qa_rnn_forward.1} parent=0 // pred_check_branch
    %12 = sbr.rel (0) target = $region5
  $region4: #{qa_rnn_forward.1} parent=0 // pred_region
    _
  $region5: #{qa_rnn_forward.1} parent=0 // pred_fallthru
    _
  // Predicated region
  $region6: #{qa_rnn_forward.1} parent=0 // pred_check
    _
  $region7: #{qa_rnn_forward.1} parent=0 // pred_check_branch
    %14 = sbr.rel (0) target = $region9
  $region8: #{qa_rnn_forward.1} parent=0 // pred_region
    _
  $region9: #{qa_rnn_forward.1} parent=0 // pred_fallthru
    _
  // Predicated region
  $region10: #{qa_rnn_forward.1} parent=0 // pred_check
    _
  $region11: #{qa_rnn_forward.1} parent=0 // pred_check_branch
    %16 = sbr.rel (0) target = $region13
  $region12: #{qa_rnn_forward.1} parent=0 // pred_region
    _
  $region13: #{qa_rnn_forward.1} parent=0 // pred_fallthru
    _
  // Predicated region
  $region14: #{qa_rnn_forward.1} parent=0 // pred_check
    _
  $region15: #{qa_rnn_forward.1} parent=0 // pred_check_branch
    %18 = sbr.rel (0) target = $region17
  $region16: #{qa_rnn_forward.1} parent=0 // pred_region
    _
  $region17: #{qa_rnn_forward.1} parent=0 // pred_fallthru
    _
  // Predicated region
  $region18: #{qa_rnn_forward.1} parent=0 // pred_check
    _
  $region19: #{qa_rnn_forward.1} parent=0 // pred_check_branch
    %20 = sbr.rel (0) target = $region21
  $region20: #{qa_rnn_forward.1} parent=0 // pred_region
    _
  $region21: #{qa_rnn_forward.1} parent=0 // pred_fallthru
    _
  // Predicated region
  $region22: #{qa_rnn_forward.1} parent=0 // pred_check
    _
  $region23: #{qa_rnn_forward.1} parent=0 // pred_check_branch
    %22 = sbr.rel (0) target = $region25
  $region24: #{qa_rnn_forward.1} parent=0 // pred_region
    _
  $region25: #{qa_rnn_forward.1} parent=0 // pred_fallthru
    _
  %v23 = vld [vmem:[%s0] sm:$0xff]
  %v24 = vld [vmem:[%s0 + $0x8] sm:$0xff]
  %v25 = vld [vmem:[%s0 + $0x10] sm:$0xff]
  %v26 = vld [vmem:[%s0 + $0x18] sm:$0xff]
  %v27 = vld [vmem:[%s0 + $0x20] sm:$0xff]
  %v28 = vld [vmem:[%s0 + $0x28] sm:$0xff]
  %v29 = vld [vmem:[%s0 + $0x30] sm:$0xff]
  %v30 = vld [vmem:[%s0 + $0x38] sm:$0xff]
  %v31 = vld [vmem:[%s0 + $0x40] sm:$0xff]
  %v32 = vld [vmem:[%s0 + $0x48] sm:$0xff]
  %v33 = vld [vmem:[%s0 + $0x50] sm:$0xff]
  %v34 = vld [vmem:[%s0 + $0x58] sm:$0xff]
  %v35 = vld [vmem:[%s0 + $0x60] sm:$0xff]
  %v36 = vld [vmem:[%s0 + $0x68] sm:$0xff]
  %v37 = vld [vmem:[%s0 + $0x70] sm:$0xff]
  %v38 = vld [vmem:[%s0 + $0x78] sm:$0xff]
  %v39 = vlaneseq
  %v40 = vand.u32 %v39, 127
  %41 = vset.pattern.permute.xlu0 0
  %42 = vperm.xlu0 %41, %v23
  %v43 = vpop.permute.xlu0 %42
  %44 = vset.pattern.permute.xlu0 0
  %45 = vperm.xlu0 %44, %v24
  %v46 = vpop.permute.xlu0 %45
  %47 = vset.pattern.permute.xlu0 0
  %48 = vperm.xlu0 %47, %v25
  %v49 = vpop.permute.xlu0 %48
  %50 = vset.pattern.permute.xlu0 0
  %51 = vperm.xlu0 %50, %v26
  %v52 = vpop.permute.xlu0 %51
  %53 = vset.pattern.permute.xlu0 0
  %54 = vperm.xlu0 %53, %v27
  %v55 = vpop.permute.xlu0 %54
  %56 = vset.pattern.permute.xlu0 0
  %57 = vperm.xlu0 %56, %v28
  %v58 = vpop.permute.xlu0 %57
  %59 = vset.pattern.permute.xlu0 0
  %60 = vperm.xlu0 %59, %v29
  %v61 = vpop.permute.xlu0 %60
  %62 = vset.pattern.permute.xlu0 0
  %63 = vperm.xlu0 %62, %v30
  %v64 = vpop.permute.xlu0 %63
  %65 = vset.pattern.permute.xlu0 0
  %66 = vperm.xlu0 %65, %v31
  %v67 = vpop.permute.xlu0 %66
  %68 = vset.pattern.permute.xlu0 0
  %69 = vperm.xlu0 %68, %v32
  %v70 = vpop.permute.xlu0 %69
  %71 = vset.pattern.permute.xlu0 0
  %72 = vperm.xlu0 %71, %v33
  %v73 = vpop.permute.xlu0 %72
  %74 = vset.pattern.permute.xlu0 0
  %75 = vperm.xlu0 %74, %v34
  %v76 = vpop.permute.xlu0 %75
  %77 = vset.pattern.permute.xlu0 0
  %78 = vperm.xlu0 %77, %v35
  %v79 = vpop.permute.xlu0 %78
  %80 = vset.pattern.permute.xlu0 0
  %81 = vperm.xlu0 %80, %v36
  %v82 = vpop.permute.xlu0 %81
  %83 = vset.pattern.permute.xlu0 0
  %84 = vperm.xlu0 %83, %v37
  %v85 = vpop.permute.xlu0 %84
  %86 = vset.pattern.permute.xlu0 0
  %87 = vperm.xlu0 %86, %v38
  %v88 = vpop.permute.xlu0 %87
  %vm89 = vcmp.eq.s32.totalorder %v40, %v43
  %vm90 = vcmp.eq.s32.totalorder %v40, %v46
  %vm91 = vcmp.eq.s32.totalorder %v40, %v49
  %vm92 = vcmp.eq.s32.totalorder %v40, %v52
  %vm93 = vcmp.eq.s32.totalorder %v40, %v55
  %vm94 = vcmp.eq.s32.totalorder %v40, %v58
  %vm95 = vcmp.eq.s32.totalorder %v40, %v61
  %vm96 = vcmp.eq.s32.totalorder %v40, %v64
  %vm97 = vcmp.eq.s32.totalorder %v40, %v67
  %vm98 = vcmp.eq.s32.totalorder %v40, %v70
  %vm99 = vcmp.eq.s32.totalorder %v40, %v73
  %vm100 = vcmp.eq.s32.totalorder %v40, %v76
  %vm101 = vcmp.eq.s32.totalorder %v40, %v79
  %vm102 = vcmp.eq.s32.totalorder %v40, %v82
  %vm103 = vcmp.eq.s32.totalorder %v40, %v85
  %vm104 = vcmp.eq.s32.totalorder %v40, %v88
  %v105 = vsel %vm89, 1, 0
  %v106 = vsel %vm90, 1, 0
  %v107 = vsel %vm91, 1, 0
  %v108 = vsel %vm92, 1, 0
  %v109 = vsel %vm93, 1, 0
  %v110 = vsel %vm94, 1, 0
  %v111 = vsel %vm95, 1, 0
  %v112 = vsel %vm96, 1, 0
  %v113 = vsel %vm97, 1, 0
  %v114 = vsel %vm98, 1, 0
  %v115 = vsel %vm99, 1, 0
  %v116 = vsel %vm100, 1, 0
  %v117 = vsel %vm101, 1, 0
  %v118 = vsel %vm102, 1, 0
  %v119 = vsel %vm103, 1, 0
  %v120 = vsel %vm104, 1, 0
  %v121 = vcvt.s32.f32 %v105
  %v122 = vcvt.s32.f32 %v106
  %v123 = vcvt.s32.f32 %v107
  %v124 = vcvt.s32.f32 %v108
  %v125 = vcvt.s32.f32 %v109
  %v126 = vcvt.s32.f32 %v110
  %v127 = vcvt.s32.f32 %v111
  %v128 = vcvt.s32.f32 %v112
  %v129 = vcvt.s32.f32 %v113
  %v130 = vcvt.s32.f32 %v114
  %v131 = vcvt.s32.f32 %v115
  %v132 = vcvt.s32.f32 %v116
  %v133 = vcvt.s32.f32 %v117
  %v134 = vcvt.s32.f32 %v118
  %v135 = vcvt.s32.f32 %v119
  %v136 = vcvt.s32.f32 %v120
  %v137 = vld [vmem:[%s1] sm:$0xff]
  %v138 = vld [vmem:[%s1 + $0x8] sm:$0xff]
  %v139 = vld [vmem:[%s1 + $0x10] sm:$0xff]
  %v140 = vld [vmem:[%s1 + $0x18] sm:$0xff]
  %v141 = vld [vmem:[%s1 + $0x20] sm:$0xff]
  %v142 = vld [vmem:[%s1 + $0x28] sm:$0xff]
  %v143 = vld [vmem:[%s1 + $0x30] sm:$0x3]
  %vm144 = vcmask 408576
  %v146 = vsel %vm144, %v121, 0
  %v149 = vsel %vm144, %v122, 0
  %v152 = vsel %vm144, %v123, 0
  %v155 = vsel %vm144, %v124, 0
  %v158 = vsel %vm144, %v125, 0
  %v161 = vsel %vm144, %v126, 0
  %v164 = vsel %vm144, %v127, 0
  %v167 = vsel %vm144, %v128, 0
  %v170 = vsel %vm144, %v129, 0
  %v173 = vsel %vm144, %v130, 0
  %v176 = vsel %vm144, %v131, 0
  %v179 = vsel %vm144, %v132, 0
  %v182 = vsel %vm144, %v133, 0
  %v185 = vsel %vm144, %v134, 0
  %v188 = vsel %vm144, %v135, 0
  %v191 = vsel %vm144, %v136, 0
  %vm193 = vcmask 1041408
  %v195 = vsel %vm193, %v143, 0
  %197 = vmatprep.subr.mxu0 0.0
  %198 = vmatpush1.msra.mxu0 %v137
  %199 = vmatprep.subr.mxu0 0.0
  %200 = vmatpush1.msra.mxu0 %v138
  %201 = vmatprep.subr.mxu0 0.0
  %202 = vmatpush1.msra.mxu0 %v139
  %203 = vmatprep.subr.mxu0 0.0
  %204 = vmatpush1.msra.mxu0 %v140
  %205 = vmatprep.subr.mxu0 0.0
  %206 = vmatpush1.msra.mxu0 %v141
  %207 = vmatprep.subr.mxu0 0.0
  %208 = vmatpush1.msra.mxu0 %v142
  %209 = vmatprep.subr.mxu0 0.0
  %210 = vmatpush1.msra.mxu0 %v195
  %211 = vmatprep.subr.mxu0 0.0
  %212 = vmatpush1.msra.mxu0 0.0
  %213 = vmatprep.subr.mxu0 0.0
  %214 = vmatpush1.msra.mxu0 0.0
  %215 = vmatprep.subr.mxu0 0.0
  %216 = vmatpush1.msra.mxu0 0.0
  %217 = vmatprep.subr.mxu0 0.0
  %218 = vmatpush1.msra.mxu0 0.0
  %219 = vmatprep.subr.mxu0 0.0
  %220 = vmatpush1.msra.mxu0 0.0
  %221 = vmatprep.subr.mxu0 0.0
  %222 = vmatpush1.msra.mxu0 0.0
  %223 = vmatprep.subr.mxu0 0.0
  %224 = vmatpush1.msra.mxu0 0.0
  %225 = vmatprep.subr.mxu0 0.0
  %226 = vmatpush1.msra.mxu0 0.0
  %227 = vmatprep.subr.mxu0 0.0
  %228 = vmatpush1.msra.mxu0 0.0
  %229 = vmatprep.subr.mxu0 0.0
  %230 = vmatpush1.msra.mxu0 0.0
  %231 = vmatprep.subr.mxu0 0.0
  %232 = vmatpush1.msra.mxu0 0.0
  %233 = vmatprep.subr.mxu0 0.0
  %234 = vmatpush1.msra.mxu0 0.0
  %235 = vmatprep.subr.mxu0 0.0
  %236 = vmatpush1.msra.mxu0 0.0
  %237 = vmatprep.subr.mxu0 0.0
  %238 = vmatpush1.msra.mxu0 0.0
  %239 = vmatprep.subr.mxu0 0.0
  %240 = vmatpush1.msra.mxu0 0.0
  %241 = vmatprep.subr.mxu0 0.0
  %242 = vmatpush1.msra.mxu0 0.0
  %243 = vmatprep.subr.mxu0 0.0
  %244 = vmatpush1.msra.mxu0 0.0
  %245 = vmatprep.subr.mxu0 0.0
  %246 = vmatpush1.msra.mxu0 0.0
  %247 = vmatprep.subr.mxu0 0.0
  %248 = vmatpush1.msra.mxu0 0.0
  %249 = vmatprep.subr.mxu0 0.0
  %250 = vmatpush1.msra.mxu0 0.0
  %251 = vmatprep.subr.mxu0 0.0
  %252 = vmatpush1.msra.mxu0 0.0
  %253 = vmatprep.subr.mxu0 0.0
  %254 = vmatpush1.msra.mxu0 0.0
  %255 = vmatprep.subr.mxu0 0.0
  %256 = vmatpush1.msra.mxu0 0.0
  %257 = vmatprep.subr.mxu0 0.0
  %258 = vmatpush1.msra.mxu0 0.0
  %259 = vmatprep.subr.mxu0 0.0
  %260 = vmatpush1.msra.mxu0 0.0
  %261 = vmatprep.mubr.f32.mxu0 0.0
  %262 = vmatmul.mubr.f32.gmra.mrb[0].mxu0 %v146
  %v263 = vpop.f32.mrb[0].mxu0
  %v264 = vadd.f32 0.0, %v263
  %v265 = vpop.f32.mrb[0].mxu0
  %266 = vmatprep.mubr.f32.mxu0 0.0
  %267 = vmatmul.mubr.f32.gmra.mrb[0].mxu0 %v149
  %v268 = vpop.f32.mrb[0].mxu0
  %v269 = vadd.f32 0.0, %v268
  %v270 = vpop.f32.mrb[0].mxu0
  %271 = vmatprep.mubr.f32.mxu0 0.0
  %272 = vmatmul.mubr.f32.gmra.mrb[0].mxu0 %v152
  %v273 = vpop.f32.mrb[0].mxu0
  %v274 = vadd.f32 0.0, %v273
  %v275 = vpop.f32.mrb[0].mxu0
  %276 = vmatprep.mubr.f32.mxu0 0.0
  %277 = vmatmul.mubr.f32.gmra.mrb[0].mxu0 %v155
  %v278 = vpop.f32.mrb[0].mxu0
  %v279 = vadd.f32 0.0, %v278
  %v280 = vpop.f32.mrb[0].mxu0
  %281 = vmatprep.mubr.f32.mxu0 0.0
  %282 = vmatmul.mubr.f32.gmra.mrb[0].mxu0 %v158
  %v283 = vpop.f32.mrb[0].mxu0
  %v284 = vadd.f32 0.0, %v283
  %v285 = vpop.f32.mrb[0].mxu0
  %286 = vmatprep.mubr.f32.mxu0 0.0
  %287 = vmatmul.mubr.f32.gmra.mrb[0].mxu0 %v161
  %v288 = vpop.f32.mrb[0].mxu0
  %v289 = vadd.f32 0.0, %v288
  %v290 = vpop.f32.mrb[0].mxu0
  %291 = vmatprep.mubr.f32.mxu0 0.0
  %292 = vmatmul.mubr.f32.gmra.mrb[0].mxu0 %v164
  %v293 = vpop.f32.mrb[0].mxu0
  %v294 = vadd.f32 0.0, %v293
  %v295 = vpop.f32.mrb[0].mxu0
  %296 = vmatprep.mubr.f32.mxu0 0.0
  %297 = vmatmul.mubr.f32.gmra.mrb[0].mxu0 %v167
  %v298 = vpop.f32.mrb[0].mxu0
  %v299 = vadd.f32 0.0, %v298
  %v300 = vpop.f32.mrb[0].mxu0
  %301 = vmatprep.mubr.f32.mxu0 0.0
  %302 = vmatmul.mubr.f32.gmra.mrb[0].mxu0 %v170
  %v303 = vpop.f32.mrb[0].mxu0
  %v304 = vadd.f32 0.0, %v303
  %v305 = vpop.f32.mrb[0].mxu0
  %306 = vmatprep.mubr.f32.mxu0 0.0
  %307 = vmatmul.mubr.f32.gmra.mrb[0].mxu0 %v173
  %v308 = vpop.f32.mrb[0].mxu0
  %v309 = vadd.f32 0.0, %v308
  %v310 = vpop.f32.mrb[0].mxu0
  %311 = vmatprep.mubr.f32.mxu0 0.0
  %312 = vmatmul.mubr.f32.gmra.mrb[0].mxu0 %v176
  %v313 = vpop.f32.mrb[0].mxu0
  %v314 = vadd.f32 0.0, %v313
  %v315 = vpop.f32.mrb[0].mxu0
  %316 = vmatprep.mubr.f32.mxu0 0.0
  %317 = vmatmul.mubr.f32.gmra.mrb[0].mxu0 %v179
  %v318 = vpop.f32.mrb[0].mxu0
  %v319 = vadd.f32 0.0, %v318
  %v320 = vpop.f32.mrb[0].mxu0
  %321 = vmatprep.mubr.f32.mxu0 0.0
  %322 = vmatmul.mubr.f32.gmra.mrb[0].mxu0 %v182
  %v323 = vpop.f32.mrb[0].mxu0
  %v324 = vadd.f32 0.0, %v323
  %v325 = vpop.f32.mrb[0].mxu0
  %326 = vmatprep.mubr.f32.mxu0 0.0
  %327 = vmatmul.mubr.f32.gmra.mrb[0].mxu0 %v185
  %v328 = vpop.f32.mrb[0].mxu0
  %v329 = vadd.f32 0.0, %v328
  %v330 = vpop.f32.mrb[0].mxu0
  %331 = vmatprep.mubr.f32.mxu0 0.0
  %332 = vmatmul.mubr.f32.gmra.mrb[0].mxu0 %v188
  %v333 = vpop.f32.mrb[0].mxu0
  %v334 = vadd.f32 0.0, %v333
  %v335 = vpop.f32.mrb[0].mxu0
  %336 = vmatprep.mubr.f32.mxu0 0.0
  %337 = vmatmul.mubr.f32.gmra.mrb[0].mxu0 %v191
  %v338 = vpop.f32.mrb[0].mxu0
  %v339 = vadd.f32 0.0, %v338
  %v340 = vpop.f32.mrb[0].mxu0
  %341 = vdwg.mxu0
  %v342 = vld [vmem:[%s2] sm:$0xff]
  %v343 = vld [vmem:[%s2 + $0x8] sm:$0xff]
  %v344 = vld [vmem:[%s2 + $0x10] sm:$0xff]
  %v345 = vld [vmem:[%s2 + $0x18] sm:$0xff]
  %v346 = vtanh.pop %v264
  %v347 = vtanh.pop %v269
  %vm348 = vcmask 261120
  %v350 = vsel %vm348, %v346, 0
  %v353 = vsel %vm348, %v347, 0
  %355 = vmatprep.subr.mxu0 0.0
  %356 = vmatpush1.msra.mxu0 %v342
  %357 = vmatprep.subr.mxu0 0.0
  %358 = vmatpush1.msra.mxu0 %v343
  %359 = vmatprep.subr.mxu0 0.0
  %360 = vmatpush1.msra.mxu0 %v344
  %361 = vmatprep.subr.mxu0 0.0
  %362 = vmatpush1.msra.mxu0 %v345
  %363 = vmatprep.subr.mxu0 0.0
  %364 = vmatpush1.msra.mxu0 0.0
  %365 = vmatprep.subr.mxu0 0.0
  %366 = vmatpush1.msra.mxu0 0.0
  %367 = vmatprep.subr.mxu0 0.0
  %368 = vmatpush1.msra.mxu0 0.0
  %369 = vmatprep.subr.mxu0 0.0
  %370 = vmatpush1.msra.mxu0 0.0
  %371 = vmatprep.subr.mxu0 0.0
  %372 = vmatpush1.msra.mxu0 0.0
  %373 = vmatprep.subr.mxu0 0.0
  %374 = vmatpush1.msra.mxu0 0.0
  %375 = vmatprep.subr.mxu0 0.0
  %376 = vmatpush1.msra.mxu0 0.0
  %377 = vmatprep.subr.mxu0 0.0
  %378 = vmatpush1.msra.mxu0 0.0
  %379 = vmatprep.subr.mxu0 0.0
  %380 = vmatpush1.msra.mxu0 0.0
  %381 = vmatprep.subr.mxu0 0.0
  %382 = vmatpush1.msra.mxu0 0.0
  %383 = vmatprep.subr.mxu0 0.0
  %384 = vmatpush1.msra.mxu0 0.0
  %385 = vmatprep.subr.mxu0 0.0
  %386 = vmatpush1.msra.mxu0 0.0
  %387 = vmatprep.subr.mxu0 0.0
  %388 = vmatpush1.msra.mxu0 0.0
  %389 = vmatprep.subr.mxu0 0.0
  %390 = vmatpush1.msra.mxu0 0.0
  %391 = vmatprep.subr.mxu0 0.0
  %392 = vmatpush1.msra.mxu0 0.0
  %393 = vmatprep.subr.mxu0 0.0
  %394 = vmatpush1.msra.mxu0 0.0
  %395 = vmatprep.subr.mxu0 0.0
  %396 = vmatpush1.msra.mxu0 0.0
  %397 = vmatprep.subr.mxu0 0.0
  %398 = vmatpush1.msra.mxu0 0.0
  %399 = vmatprep.subr.mxu0 0.0
  %400 = vmatpush1.msra.mxu0 0.0
  %401 = vmatprep.subr.mxu0 0.0
  %402 = vmatpush1.msra.mxu0 0.0
  %403 = vmatprep.subr.mxu0 0.0
  %404 = vmatpush1.msra.mxu0 0.0
  %405 = vmatprep.subr.mxu0 0.0
  %406 = vmatpush1.msra.mxu0 0.0
  %407 = vmatprep.subr.mxu0 0.0
  %408 = vmatpush1.msra.mxu0 0.0
  %409 = vmatprep.subr.mxu0 0.0
  %410 = vmatpush1.msra.mxu0 0.0
  %411 = vmatprep.subr.mxu0 0.0
  %412 = vmatpush1.msra.mxu0 0.0
  %413 = vmatprep.subr.mxu0 0.0
  %414 = vmatpush1.msra.mxu0 0.0
  %415 = vmatprep.subr.mxu0 0.0
  %416 = vmatpush1.msra.mxu0 0.0
  %417 = vmatprep.subr.mxu0 0.0
  %418 = vmatpush1.msra.mxu0 0.0
  %419 = vmatprep.mubr.f32.mxu0 0.0
  %420 = vmatmul.mubr.f32.gmra.mrb[0].mxu0 %v350
  %v421 = vpop.f32.mrb[0].mxu0
  %v422 = vadd.f32 0.0, %v421
  %v423 = vpop.f32.mrb[0].mxu0
  %424 = vmatprep.mubr.f32.mxu0 0.0
  %425 = vmatmul.mubr.f32.gmra.mrb[0].mxu0 %v353
  %v426 = vpop.f32.mrb[0].mxu0
  %v427 = vadd.f32 0.0, %v426
  %v428 = vpop.f32.mrb[0].mxu0
  %429 = vdwg.mxu0
  %v430 = vadd.f32 %v274, %v422
  %v431 = vadd.f32 %v279, %v427
  %v432 = vtanh.pop %v430
  %v433 = vtanh.pop %v431
  %v434 = vmax.f32 %v346, %v432
  %v435 = vmax.f32 %v347, %v433
  %v437 = vsel %vm348, %v432, 0
  %v440 = vsel %vm348, %v433, 0
  %442 = vmatprep.subr.mxu0 0.0
  %443 = vmatpush1.msra.mxu0 %v342
  %444 = vmatprep.subr.mxu0 0.0
  %445 = vmatpush1.msra.mxu0 %v343
  %446 = vmatprep.subr.mxu0 0.0
  %447 = vmatpush1.msra.mxu0 %v344
  %448 = vmatprep.subr.mxu0 0.0
  %449 = vmatpush1.msra.mxu0 %v345
  %450 = vmatprep.subr.mxu0 0.0
  %451 = vmatpush1.msra.mxu0 0.0
  %452 = vmatprep.subr.mxu0 0.0
  %453 = vmatpush1.msra.mxu0 0.0
  %454 = vmatprep.subr.mxu0 0.0
  %455 = vmatpush1.msra.mxu0 0.0
  %456 = vmatprep.subr.mxu0 0.0
  %457 = vmatpush1.msra.mxu0 0.0
  %458 = vmatprep.subr.mxu0 0.0
  %459 = vmatpush1.msra.mxu0 0.0
  %460 = vmatprep.subr.mxu0 0.0
  %461 = vmatpush1.msra.mxu0 0.0
  %462 = vmatprep.subr.mxu0 0.0
  %463 = vmatpush1.msra.mxu0 0.0
  %464 = vmatprep.subr.mxu0 0.0
  %465 = vmatpush1.msra.mxu0 0.0
  %466 = vmatprep.subr.mxu0 0.0
  %467 = vmatpush1.msra.mxu0 0.0
  %468 = vmatprep.subr.mxu0 0.0
  %469 = vmatpush1.msra.mxu0 0.0
  %470 = vmatprep.subr.mxu0 0.0
  %471 = vmatpush1.msra.mxu0 0.0
  %472 = vmatprep.subr.mxu0 0.0
  %473 = vmatpush1.msra.mxu0 0.0
  %474 = vmatprep.subr.mxu0 0.0
  %475 = vmatpush1.msra.mxu0 0.0
  %476 = vmatprep.subr.mxu0 0.0
  %477 = vmatpush1.msra.mxu0 0.0
  %478 = vmatprep.subr.mxu0 0.0
  %479 = vmatpush1.msra.mxu0 0.0
  %480 = vmatprep.subr.mxu0 0.0
  %481 = vmatpush1.msra.mxu0 0.0
  %482 = vmatprep.subr.mxu0 0.0
  %483 = vmatpush1.msra.mxu0 0.0
  %484 = vmatprep.subr.mxu0 0.0
  %485 = vmatpush1.msra.mxu0 0.0
  %486 = vmatprep.subr.mxu0 0.0
  %487 = vmatpush1.msra.mxu0 0.0
  %488 = vmatprep.subr.mxu0 0.0
  %489 = vmatpush1.msra.mxu0 0.0
  %490 = vmatprep.subr.mxu0 0.0
  %491 = vmatpush1.msra.mxu0 0.0
  %492 = vmatprep.subr.mxu0 0.0
  %493 = vmatpush1.msra.mxu0 0.0
  %494 = vmatprep.subr.mxu0 0.0
  %495 = vmatpush1.msra.mxu0 0.0
  %496 = vmatprep.subr.mxu0 0.0
  %497 = vmatpush1.msra.mxu0 0.0
  %498 = vmatprep.subr.mxu0 0.0
  %499 = vmatpush1.msra.mxu0 0.0
  %500 = vmatprep.subr.mxu0 0.0
  %501 = vmatpush1.msra.mxu0 0.0
  %502 = vmatprep.subr.mxu0 0.0
  %503 = vmatpush1.msra.mxu0 0.0
  %504 = vmatprep.subr.mxu0 0.0
  %505 = vmatpush1.msra.mxu0 0.0
  %506 = vmatprep.mubr.f32.mxu0 0.0
  %507 = vmatmul.mubr.f32.gmra.mrb[0].mxu0 %v437
  %v508 = vpop.f32.mrb[0].mxu0
  %v509 = vadd.f32 0.0, %v508
  %v510 = vpop.f32.mrb[0].mxu0
  %511 = vmatprep.mubr.f32.mxu0 0.0
  %512 = vmatmul.mubr.f32.gmra.mrb[0].mxu0 %v440
  %v513 = vpop.f32.mrb[0].mxu0
  %v514 = vadd.f32 0.0, %v513
  %v515 = vpop.f32.mrb[0].mxu0
  %516 = vdwg.mxu0
  %v517 = vadd.f32 %v284, %v509
  %v518 = vadd.f32 %v289, %v514
  %v519 = vtanh.pop %v517
  %v520 = vtanh.pop %v518
  %v521 = vmax.f32 %v434, %v519
  %v522 = vmax.f32 %v435, %v520
  %v524 = vsel %vm348, %v519, 0
  %v527 = vsel %vm348, %v520, 0
  %529 = vmatprep.subr.mxu0 0.0
  %530 = vmatpush1.msra.mxu0 %v342
  %531 = vmatprep.subr.mxu0 0.0
  %532 = vmatpush1.msra.mxu0 %v343
  %533 = vmatprep.subr.mxu0 0.0
  %534 = vmatpush1.msra.mxu0 %v344
  %535 = vmatprep.subr.mxu0 0.0
  %536 = vmatpush1.msra.mxu0 %v345
  %537 = vmatprep.subr.mxu0 0.0
  %538 = vmatpush1.msra.mxu0 0.0
  %539 = vmatprep.subr.mxu0 0.0
  %540 = vmatpush1.msra.mxu0 0.0
  %541 = vmatprep.subr.mxu0 0.0
  %542 = vmatpush1.msra.mxu0 0.0
  %543 = vmatprep.subr.mxu0 0.0
  %544 = vmatpush1.msra.mxu0 0.0
  %545 = vmatprep.subr.mxu0 0.0
  %546 = vmatpush1.msra.mxu0 0.0
  %547 = vmatprep.subr.mxu0 0.0
  %548 = vmatpush1.msra.mxu0 0.0
  %549 = vmatprep.subr.mxu0 0.0
  %550 = vmatpush1.msra.mxu0 0.0
  %551 = vmatprep.subr.mxu0 0.0
  %552 = vmatpush1.msra.mxu0 0.0
  %553 = vmatprep.subr.mxu0 0.0
  %554 = vmatpush1.msra.mxu0 0.0
  %555 = vmatprep.subr.mxu0 0.0
  %556 = vmatpush1.msra.mxu0 0.0
  %557 = vmatprep.subr.mxu0 0.0
  %558 = vmatpush1.msra.mxu0 0.0
  %559 = vmatprep.subr.mxu0 0.0
  %560 = vmatpush1.msra.mxu0 0.0
  %561 = vmatprep.subr.mxu0 0.0
  %562 = vmatpush1.msra.mxu0 0.0
  %563 = vmatprep.subr.mxu0 0.0
  %564 = vmatpush1.msra.mxu0 0.0
  %565 = vmatprep.subr.mxu0 0.0
  %566 = vmatpush1.msra.mxu0 0.0
  %567 = vmatprep.subr.mxu0 0.0
  %568 = vmatpush1.msra.mxu0 0.0
  %569 = vmatprep.subr.mxu0 0.0
  %570 = vmatpush1.msra.mxu0 0.0
  %571 = vmatprep.subr.mxu0 0.0
  %572 = vmatpush1.msra.mxu0 0.0
  %573 = vmatprep.subr.mxu0 0.0
  %574 = vmatpush1.msra.mxu0 0.0
  %575 = vmatprep.subr.mxu0 0.0
  %576 = vmatpush1.msra.mxu0 0.0
  %577 = vmatprep.subr.mxu0 0.0
  %578 = vmatpush1.msra.mxu0 0.0
  %579 = vmatprep.subr.mxu0 0.0
  %580 = vmatpush1.msra.mxu0 0.0
  %581 = vmatprep.subr.mxu0 0.0
  %582 = vmatpush1.msra.mxu0 0.0
  %583 = vmatprep.subr.mxu0 0.0
  %584 = vmatpush1.msra.mxu0 0.0
  %585 = vmatprep.subr.mxu0 0.0
  %586 = vmatpush1.msra.mxu0 0.0
  %587 = vmatprep.subr.mxu0 0.0
  %588 = vmatpush1.msra.mxu0 0.0
  %589 = vmatprep.subr.mxu0 0.0
  %590 = vmatpush1.msra.mxu0 0.0
  %591 = vmatprep.subr.mxu0 0.0
  %592 = vmatpush1.msra.mxu0 0.0
  %593 = vmatprep.mubr.f32.mxu0 0.0
  %594 = vmatmul.mubr.f32.gmra.mrb[0].mxu0 %v524
  %v595 = vpop.f32.mrb[0].mxu0
  %v596 = vadd.f32 0.0, %v595
  %v597 = vpop.f32.mrb[0].mxu0
  %598 = vmatprep.mubr.f32.mxu0 0.0
  %599 = vmatmul.mubr.f32.gmra.mrb[0].mxu0 %v527
  %v600 = vpop.f32.mrb[0].mxu0
  %v601 = vadd.f32 0.0, %v600
  %v602 = vpop.f32.mrb[0].mxu0
  %603 = vdwg.mxu0
  %v604 = vadd.f32 %v294, %v596
  %v605 = vadd.f32 %v299, %v601
  %v606 = vtanh.pop %v604
  %v607 = vtanh.pop %v605
  %v608 = vmax.f32 %v521, %v606
  %v609 = vmax.f32 %v522, %v607
  %v611 = vsel %vm348, %v606, 0
  %v614 = vsel %vm348, %v607, 0
  %616 = vmatprep.subr.mxu0 0.0
  %617 = vmatpush1.msra.mxu0 %v342
  %618 = vmatprep.subr.mxu0 0.0
  %619 = vmatpush1.msra.mxu0 %v343
  %620 = vmatprep.subr.mxu0 0.0
  %621 = vmatpush1.msra.mxu0 %v344
  %622 = vmatprep.subr.mxu0 0.0
  %623 = vmatpush1.msra.mxu0 %v345
  %624 = vmatprep.subr.mxu0 0.0
  %625 = vmatpush1.msra.mxu0 0.0
  %626 = vmatprep.subr.mxu0 0.0
  %627 = vmatpush1.msra.mxu0 0.0
  %628 = vmatprep.subr.mxu0 0.0
  %629 = vmatpush1.msra.mxu0 0.0
  %630 = vmatprep.subr.mxu0 0.0
  %631 = vmatpush1.msra.mxu0 0.0
  %632 = vmatprep.subr.mxu0 0.0
  %633 = vmatpush1.msra.mxu0 0.0
  %634 = vmatprep.subr.mxu0 0.0
  %635 = vmatpush1.msra.mxu0 0.0
  %636 = vmatprep.subr.mxu0 0.0
  %637 = vmatpush1.msra.mxu0 0.0
  %638 = vmatprep.subr.mxu0 0.0
  %639 = vmatpush1.msra.mxu0 0.0
  %640 = vmatprep.subr.mxu0 0.0
  %641 = vmatpush1.msra.mxu0 0.0
  %642 = vmatprep.subr.mxu0 0.0
  %643 = vmatpush1.msra.mxu0 0.0
  %644 = vmatprep.subr.mxu0 0.0
  %645 = vmatpush1.msra.mxu0 0.0
  %646 = vmatprep.subr.mxu0 0.0
  %647 = vmatpush1.msra.mxu0 0.0
  %648 = vmatprep.subr.mxu0 0.0
  %649 = vmatpush1.msra.mxu0 0.0
  %650 = vmatprep.subr.mxu0 0.0
  %651 = vmatpush1.msra.mxu0 0.0
  %652 = vmatprep.subr.mxu0 0.0
  %653 = vmatpush1.msra.mxu0 0.0
  %654 = vmatprep.subr.mxu0 0.0
  %655 = vmatpush1.msra.mxu0 0.0
  %656 = vmatprep.subr.mxu0 0.0
  %657 = vmatpush1.msra.mxu0 0.0
  %658 = vmatprep.subr.mxu0 0.0
  %659 = vmatpush1.msra.mxu0 0.0
  %660 = vmatprep.subr.mxu0 0.0
  %661 = vmatpush1.msra.mxu0 0.0
  %662 = vmatprep.subr.mxu0 0.0
  %663 = vmatpush1.msra.mxu0 0.0
  %664 = vmatprep.subr.mxu0 0.0
  %665 = vmatpush1.msra.mxu0 0.0
  %666 = vmatprep.subr.mxu0 0.0
  %667 = vmatpush1.msra.mxu0 0.0
  %668 = vmatprep.subr.mxu0 0.0
  %669 = vmatpush1.msra.mxu0 0.0
  %670 = vmatprep.subr.mxu0 0.0
  %671 = vmatpush1.msra.mxu0 0.0
  %672 = vmatprep.subr.mxu0 0.0
  %673 = vmatpush1.msra.mxu0 0.0
  %674 = vmatprep.subr.mxu0 0.0
  %675 = vmatpush1.msra.mxu0 0.0
  %676 = vmatprep.subr.mxu0 0.0
  %677 = vmatpush1.msra.mxu0 0.0
  %678 = vmatprep.subr.mxu0 0.0
  %679 = vmatpush1.msra.mxu0 0.0
  %680 = vmatprep.mubr.f32.mxu0 0.0
  %681 = vmatmul.mubr.f32.gmra.mrb[0].mxu0 %v611
  %v682 = vpop.f32.mrb[0].mxu0
  %v683 = vadd.f32 0.0, %v682
  %v684 = vpop.f32.mrb[0].mxu0
  %685 = vmatprep.mubr.f32.mxu0 0.0
  %686 = vmatmul.mubr.f32.gmra.mrb[0].mxu0 %v614
  %v687 = vpop.f32.mrb[0].mxu0
  %v688 = vadd.f32 0.0, %v687
  %v689 = vpop.f32.mrb[0].mxu0
  %690 = vdwg.mxu0
  %v691 = vadd.f32 %v304, %v683
  %v692 = vadd.f32 %v309, %v688
  %v693 = vtanh.pop %v691
  %v694 = vtanh.pop %v692
  %v695 = vmax.f32 %v608, %v693
  %v696 = vmax.f32 %v609, %v694
  %v698 = vsel %vm348, %v693, 0
  %v701 = vsel %vm348, %v694, 0
  %703 = vmatprep.subr.mxu0 0.0
  %704 = vmatpush1.msra.mxu0 %v342
  %705 = vmatprep.subr.mxu0 0.0
  %706 = vmatpush1.msra.mxu0 %v343
  %707 = vmatprep.subr.mxu0 0.0
  %708 = vmatpush1.msra.mxu0 %v344
  %709 = vmatprep.subr.mxu0 0.0
  %710 = vmatpush1.msra.mxu0 %v345
  %711 = vmatprep.subr.mxu0 0.0
  %712 = vmatpush1.msra.mxu0 0.0
  %713 = vmatprep.subr.mxu0 0.0
  %714 = vmatpush1.msra.mxu0 0.0
  %715 = vmatprep.subr.mxu0 0.0
  %716 = vmatpush1.msra.mxu0 0.0
  %717 = vmatprep.subr.mxu0 0.0
  %718 = vmatpush1.msra.mxu0 0.0
  %719 = vmatprep.subr.mxu0 0.0
  %720 = vmatpush1.msra.mxu0 0.0
  %721 = vmatprep.subr.mxu0 0.0
  %722 = vmatpush1.msra.mxu0 0.0
  %723 = vmatprep.subr.mxu0 0.0
  %724 = vmatpush1.msra.mxu0 0.0
  %725 = vmatprep.subr.mxu0 0.0
  %726 = vmatpush1.msra.mxu0 0.0
  %727 = vmatprep.subr.mxu0 0.0
  %728 = vmatpush1.msra.mxu0 0.0
  %729 = vmatprep.subr.mxu0 0.0
  %730 = vmatpush1.msra.mxu0 0.0
  %731 = vmatprep.subr.mxu0 0.0
  %732 = vmatpush1.msra.mxu0 0.0
  %733 = vmatprep.subr.mxu0 0.0
  %734 = vmatpush1.msra.mxu0 0.0
  %735 = vmatprep.subr.mxu0 0.0
  %736 = vmatpush1.msra.mxu0 0.0
  %737 = vmatprep.subr.mxu0 0.0
  %738 = vmatpush1.msra.mxu0 0.0
  %739 = vmatprep.subr.mxu0 0.0
  %740 = vmatpush1.msra.mxu0 0.0
  %741 = vmatprep.subr.mxu0 0.0
  %742 = vmatpush1.msra.mxu0 0.0
  %743 = vmatprep.subr.mxu0 0.0
  %744 = vmatpush1.msra.mxu0 0.0
  %745 = vmatprep.subr.mxu0 0.0
  %746 = vmatpush1.msra.mxu0 0.0
  %747 = vmatprep.subr.mxu0 0.0
  %748 = vmatpush1.msra.mxu0 0.0
  %749 = vmatprep.subr.mxu0 0.0
  %750 = vmatpush1.msra.mxu0 0.0
  %751 = vmatprep.subr.mxu0 0.0
  %752 = vmatpush1.msra.mxu0 0.0
  %753 = vmatprep.subr.mxu0 0.0
  %754 = vmatpush1.msra.mxu0 0.0
  %755 = vmatprep.subr.mxu0 0.0
  %756 = vmatpush1.msra.mxu0 0.0
  %757 = vmatprep.subr.mxu0 0.0
  %758 = vmatpush1.msra.mxu0 0.0
  %759 = vmatprep.subr.mxu0 0.0
  %760 = vmatpush1.msra.mxu0 0.0
  %761 = vmatprep.subr.mxu0 0.0
  %762 = vmatpush1.msra.mxu0 0.0
  %763 = vmatprep.subr.mxu0 0.0
  %764 = vmatpush1.msra.mxu0 0.0
  %765 = vmatprep.subr.mxu0 0.0
  %766 = vmatpush1.msra.mxu0 0.0
  %767 = vmatprep.mubr.f32.mxu0 0.0
  %768 = vmatmul.mubr.f32.gmra.mrb[0].mxu0 %v698
  %v769 = vpop.f32.mrb[0].mxu0
  %v770 = vadd.f32 0.0, %v769
  %v771 = vpop.f32.mrb[0].mxu0
  %772 = vmatprep.mubr.f32.mxu0 0.0
  %773 = vmatmul.mubr.f32.gmra.mrb[0].mxu0 %v701
  %v774 = vpop.f32.mrb[0].mxu0
  %v775 = vadd.f32 0.0, %v774
  %v776 = vpop.f32.mrb[0].mxu0
  %777 = vdwg.mxu0
  %v778 = vadd.f32 %v314, %v770
  %v779 = vadd.f32 %v319, %v775
  %v780 = vtanh.pop %v778
  %v781 = vtanh.pop %v779
  %v782 = vmax.f32 %v695, %v780
  %v783 = vmax.f32 %v696, %v781
  %v785 = vsel %vm348, %v780, 0
  %v788 = vsel %vm348, %v781, 0
  %790 = vmatprep.subr.mxu0 0.0
  %791 = vmatpush1.msra.mxu0 %v342
  %792 = vmatprep.subr.mxu0 0.0
  %793 = vmatpush1.msra.mxu0 %v343
  %794 = vmatprep.subr.mxu0 0.0
  %795 = vmatpush1.msra.mxu0 %v344
  %796 = vmatprep.subr.mxu0 0.0
  %797 = vmatpush1.msra.mxu0 %v345
  %798 = vmatprep.subr.mxu0 0.0
  %799 = vmatpush1.msra.mxu0 0.0
  %800 = vmatprep.subr.mxu0 0.0
  %801 = vmatpush1.msra.mxu0 0.0
  %802 = vmatprep.subr.mxu0 0.0
  %803 = vmatpush1.msra.mxu0 0.0
  %804 = vmatprep.subr.mxu0 0.0
  %805 = vmatpush1.msra.mxu0 0.0
  %806 = vmatprep.subr.mxu0 0.0
  %807 = vmatpush1.msra.mxu0 0.0
  %808 = vmatprep.subr.mxu0 0.0
  %809 = vmatpush1.msra.mxu0 0.0
  %810 = vmatprep.subr.mxu0 0.0
  %811 = vmatpush1.msra.mxu0 0.0
  %812 = vmatprep.subr.mxu0 0.0
  %813 = vmatpush1.msra.mxu0 0.0
  %814 = vmatprep.subr.mxu0 0.0
  %815 = vmatpush1.msra.mxu0 0.0
  %816 = vmatprep.subr.mxu0 0.0
  %817 = vmatpush1.msra.mxu0 0.0
  %818 = vmatprep.subr.mxu0 0.0
  %819 = vmatpush1.msra.mxu0 0.0
  %820 = vmatprep.subr.mxu0 0.0
  %821 = vmatpush1.msra.mxu0 0.0
  %822 = vmatprep.subr.mxu0 0.0
  %823 = vmatpush1.msra.mxu0 0.0
  %824 = vmatprep.subr.mxu0 0.0
  %825 = vmatpush1.msra.mxu0 0.0
  %826 = vmatprep.subr.mxu0 0.0
  %827 = vmatpush1.msra.mxu0 0.0
  %828 = vmatprep.subr.mxu0 0.0
  %829 = vmatpush1.msra.mxu0 0.0
  %830 = vmatprep.subr.mxu0 0.0
  %831 = vmatpush1.msra.mxu0 0.0
  %832 = vmatprep.subr.mxu0 0.0
  %833 = vmatpush1.msra.mxu0 0.0
  %834 = vmatprep.subr.mxu0 0.0
  %835 = vmatpush1.msra.mxu0 0.0
  %836 = vmatprep.subr.mxu0 0.0
  %837 = vmatpush1.msra.mxu0 0.0
  %838 = vmatprep.subr.mxu0 0.0
  %839 = vmatpush1.msra.mxu0 0.0
  %840 = vmatprep.subr.mxu0 0.0
  %841 = vmatpush1.msra.mxu0 0.0
  %842 = vmatprep.subr.mxu0 0.0
  %843 = vmatpush1.msra.mxu0 0.0
  %844 = vmatprep.subr.mxu0 0.0
  %845 = vmatpush1.msra.mxu0 0.0
  %846 = vmatprep.subr.mxu0 0.0
  %847 = vmatpush1.msra.mxu0 0.0
  %848 = vmatprep.subr.mxu0 0.0
  %849 = vmatpush1.msra.mxu0 0.0
  %850 = vmatprep.subr.mxu0 0.0
  %851 = vmatpush1.msra.mxu0 0.0
  %852 = vmatprep.subr.mxu0 0.0
  %853 = vmatpush1.msra.mxu0 0.0
  %854 = vmatprep.mubr.f32.mxu0 0.0
  %855 = vmatmul.mubr.f32.gmra.mrb[0].mxu0 %v785
  %v856 = vpop.f32.mrb[0].mxu0
  %v857 = vadd.f32 0.0, %v856
  %v858 = vpop.f32.mrb[0].mxu0
  %859 = vmatprep.mubr.f32.mxu0 0.0
  %860 = vmatmul.mubr.f32.gmra.mrb[0].mxu0 %v788
  %v861 = vpop.f32.mrb[0].mxu0
  %v862 = vadd.f32 0.0, %v861
  %v863 = vpop.f32.mrb[0].mxu0
  %864 = vdwg.mxu0
  %v865 = vadd.f32 %v324, %v857
  %v866 = vadd.f32 %v329, %v862
  %v867 = vtanh.pop %v865
  %v868 = vtanh.pop %v866
  %v869 = vmax.f32 %v782, %v867
  %v870 = vmax.f32 %v783, %v868
  %v872 = vsel %vm348, %v867, 0
  %v875 = vsel %vm348, %v868, 0
  %877 = vmatprep.subr.mxu0 0.0
  %878 = vmatpush1.msra.mxu0 %v342
  %879 = vmatprep.subr.mxu0 0.0
  %880 = vmatpush1.msra.mxu0 %v343
  %881 = vmatprep.subr.mxu0 0.0
  %882 = vmatpush1.msra.mxu0 %v344
  %883 = vmatprep.subr.mxu0 0.0
  %884 = vmatpush1.msra.mxu0 %v345
  %885 = vmatprep.subr.mxu0 0.0
  %886 = vmatpush1.msra.mxu0 0.0
  %887 = vmatprep.subr.mxu0 0.0
  %888 = vmatpush1.msra.mxu0 0.0
  %889 = vmatprep.subr.mxu0 0.0
  %890 = vmatpush1.msra.mxu0 0.0
  %891 = vmatprep.subr.mxu0 0.0
  %892 = vmatpush1.msra.mxu0 0.0
  %893 = vmatprep.subr.mxu0 0.0
  %894 = vmatpush1.msra.mxu0 0.0
  %895 = vmatprep.subr.mxu0 0.0
  %896 = vmatpush1.msra.mxu0 0.0
  %897 = vmatprep.subr.mxu0 0.0
  %898 = vmatpush1.msra.mxu0 0.0
  %899 = vmatprep.subr.mxu0 0.0
  %900 = vmatpush1.msra.mxu0 0.0
  %901 = vmatprep.subr.mxu0 0.0
  %902 = vmatpush1.msra.mxu0 0.0
  %903 = vmatprep.subr.mxu0 0.0
  %904 = vmatpush1.msra.mxu0 0.0
  %905 = vmatprep.subr.mxu0 0.0
  %906 = vmatpush1.msra.mxu0 0.0
  %907 = vmatprep.subr.mxu0 0.0
  %908 = vmatpush1.msra.mxu0 0.0
  %909 = vmatprep.subr.mxu0 0.0
  %910 = vmatpush1.msra.mxu0 0.0
  %911 = vmatprep.subr.mxu0 0.0
  %912 = vmatpush1.msra.mxu0 0.0
  %913 = vmatprep.subr.mxu0 0.0
  %914 = vmatpush1.msra.mxu0 0.0
  %915 = vmatprep.subr.mxu0 0.0
  %916 = vmatpush1.msra.mxu0 0.0
  %917 = vmatprep.subr.mxu0 0.0
  %918 = vmatpush1.msra.mxu0 0.0
  %919 = vmatprep.subr.mxu0 0.0
  %920 = vmatpush1.msra.mxu0 0.0
  %921 = vmatprep.subr.mxu0 0.0
  %922 = vmatpush1.msra.mxu0 0.0
  %923 = vmatprep.subr.mxu0 0.0
  %924 = vmatpush1.msra.mxu0 0.0
  %925 = vmatprep.subr.mxu0 0.0
  %926 = vmatpush1.msra.mxu0 0.0
  %927 = vmatprep.subr.mxu0 0.0
  %928 = vmatpush1.msra.mxu0 0.0
  %929 = vmatprep.subr.mxu0 0.0
  %930 = vmatpush1.msra.mxu0 0.0
  %931 = vmatprep.subr.mxu0 0.0
  %932 = vmatpush1.msra.mxu0 0.0
  %933 = vmatprep.subr.mxu0 0.0
  %934 = vmatpush1.msra.mxu0 0.0
  %935 = vmatprep.subr.mxu0 0.0
  %936 = vmatpush1.msra.mxu0 0.0
  %937 = vmatprep.subr.mxu0 0.0
  %938 = vmatpush1.msra.mxu0 0.0
  %939 = vmatprep.subr.mxu0 0.0
  %940 = vmatpush1.msra.mxu0 0.0
  %941 = vmatprep.mubr.f32.mxu0 0.0
  %942 = vmatmul.mubr.f32.gmra.mrb[0].mxu0 %v872
  %v943 = vpop.f32.mrb[0].mxu0
  %v944 = vadd.f32 0.0, %v943
  %v945 = vpop.f32.mrb[0].mxu0
  %946 = vmatprep.mubr.f32.mxu0 0.0
  %947 = vmatmul.mubr.f32.gmra.mrb[0].mxu0 %v875
  %v948 = vpop.f32.mrb[0].mxu0
  %v949 = vadd.f32 0.0, %v948
  %v950 = vpop.f32.mrb[0].mxu0
  %951 = vdwg.mxu0
  %v952 = vadd.f32 %v334, %v944
  %v953 = vadd.f32 %v339, %v949
  %v954 = vtanh.pop %v952
  %v955 = vtanh.pop %v953
  %v956 = vmax.f32 %v869, %v954
  %v957 = vmax.f32 %v870, %v955
  %v958 = vld [vmem:[%s3] sm:$0xff]
  %v959 = vld [vmem:[%s3 + $0x8] sm:$0xff]
  %v960 = vld [vmem:[%s3 + $0x10] sm:$0xff]
  %v961 = vld [vmem:[%s3 + $0x18] sm:$0xff]
  %v962 = vld [vmem:[%s4] sm:$0xff]
  %v963 = vld [vmem:[%s4 + $0x8] sm:$0xff]
  %v964 = vld [vmem:[%s4 + $0x10] sm:$0xff]
  %v965 = vld [vmem:[%s4 + $0x18] sm:$0xff]
  %v967 = vsel %vm348, %v957, 0
  %969 = vmatprep.subr.mxu0 0.0
  %970 = vmatpush1.msra.mxu0 %v962
  %971 = vmatprep.subr.mxu0 0.0
  %972 = vmatpush1.msra.mxu0 %v963
  %973 = vmatprep.subr.mxu0 0.0
  %974 = vmatpush1.msra.mxu0 %v964
  %975 = vmatprep.subr.mxu0 0.0
  %976 = vmatpush1.msra.mxu0 %v965
  %977 = vmatprep.subr.mxu0 0.0
  %978 = vmatpush1.msra.mxu0 0.0
  %979 = vmatprep.subr.mxu0 0.0
  %980 = vmatpush1.msra.mxu0 0.0
  %981 = vmatprep.subr.mxu0 0.0
  %982 = vmatpush1.msra.mxu0 0.0
  %983 = vmatprep.subr.mxu0 0.0
  %984 = vmatpush1.msra.mxu0 0.0
  %985 = vmatprep.subr.mxu0 0.0
  %986 = vmatpush1.msra.mxu0 0.0
  %987 = vmatprep.subr.mxu0 0.0
  %988 = vmatpush1.msra.mxu0 0.0
  %989 = vmatprep.subr.mxu0 0.0
  %990 = vmatpush1.msra.mxu0 0.0
  %991 = vmatprep.subr.mxu0 0.0
  %992 = vmatpush1.msra.mxu0 0.0
  %993 = vmatprep.subr.mxu0 0.0
  %994 = vmatpush1.msra.mxu0 0.0
  %995 = vmatprep.subr.mxu0 0.0
  %996 = vmatpush1.msra.mxu0 0.0
  %997 = vmatprep.subr.mxu0 0.0
  %998 = vmatpush1.msra.mxu0 0.0
  %999 = vmatprep.subr.mxu0 0.0
  %1000 = vmatpush1.msra.mxu0 0.0
  %1001 = vmatprep.subr.mxu0 0.0
  %1002 = vmatpush1.msra.mxu0 0.0
  %1003 = vmatprep.subr.mxu0 0.0
  %1004 = vmatpush1.msra.mxu0 0.0
  %1005 = vmatprep.subr.mxu0 0.0
  %1006 = vmatpush1.msra.mxu0 0.0
  %1007 = vmatprep.subr.mxu0 0.0
  %1008 = vmatpush1.msra.mxu0 0.0
  %1009 = vmatprep.subr.mxu0 0.0
  %1010 = vmatpush1.msra.mxu0 0.0
  %1011 = vmatprep.subr.mxu0 0.0
  %1012 = vmatpush1.msra.mxu0 0.0
  %1013 = vmatprep.subr.mxu0 0.0
  %1014 = vmatpush1.msra.mxu0 0.0
  %1015 = vmatprep.subr.mxu0 0.0
  %1016 = vmatpush1.msra.mxu0 0.0
  %1017 = vmatprep.subr.mxu0 0.0
  %1018 = vmatpush1.msra.mxu0 0.0
  %1019 = vmatprep.subr.mxu0 0.0
  %1020 = vmatpush1.msra.mxu0 0.0
  %1021 = vmatprep.subr.mxu0 0.0
  %1022 = vmatpush1.msra.mxu0 0.0
  %1023 = vmatprep.subr.mxu0 0.0
  %1024 = vmatpush1.msra.mxu0 0.0
  %1025 = vmatprep.subr.mxu0 0.0
  %1026 = vmatpush1.msra.mxu0 0.0
  %1027 = vmatprep.subr.mxu0 0.0
  %1028 = vmatpush1.msra.mxu0 0.0
  %1029 = vmatprep.subr.mxu0 0.0
  %1030 = vmatpush1.msra.mxu0 0.0
  %1031 = vmatprep.subr.mxu0 0.0
  %1032 = vmatpush1.msra.mxu0 0.0
  %1033 = vmatprep.mubr.f32.mxu0 0.0
  %1034 = vmatmul.mubr.f32.gmra.mrb[0].mxu0 %v967
  %v1035 = vpop.f32.mrb[0].mxu0
  %v1036 = vadd.f32 0.0, %v1035
  %v1037 = vpop.f32.mrb[0].mxu0
  %1038 = vdwg.mxu0
  %v1040 = vsel %vm348, %v956, 0
  %1042 = vmatprep.subr.mxu0 0.0
  %1043 = vmatpush1.msra.mxu0 %v958
  %1044 = vmatprep.subr.mxu0 0.0
  %1045 = vmatpush1.msra.mxu0 %v959
  %1046 = vmatprep.subr.mxu0 0.0
  %1047 = vmatpush1.msra.mxu0 %v960
  %1048 = vmatprep.subr.mxu0 0.0
  %1049 = vmatpush1.msra.mxu0 %v961
  %1050 = vmatprep.subr.mxu0 0.0
  %1051 = vmatpush1.msra.mxu0 0.0
  %1052 = vmatprep.subr.mxu0 0.0
  %1053 = vmatpush1.msra.mxu0 0.0
  %1054 = vmatprep.subr.mxu0 0.0
  %1055 = vmatpush1.msra.mxu0 0.0
  %1056 = vmatprep.subr.mxu0 0.0
  %1057 = vmatpush1.msra.mxu0 0.0
  %1058 = vmatprep.subr.mxu0 0.0
  %1059 = vmatpush1.msra.mxu0 0.0
  %1060 = vmatprep.subr.mxu0 0.0
  %1061 = vmatpush1.msra.mxu0 0.0
  %1062 = vmatprep.subr.mxu0 0.0
  %1063 = vmatpush1.msra.mxu0 0.0
  %1064 = vmatprep.subr.mxu0 0.0
  %1065 = vmatpush1.msra.mxu0 0.0
  %1066 = vmatprep.subr.mxu0 0.0
  %1067 = vmatpush1.msra.mxu0 0.0
  %1068 = vmatprep.subr.mxu0 0.0
  %1069 = vmatpush1.msra.mxu0 0.0
  %1070 = vmatprep.subr.mxu0 0.0
  %1071 = vmatpush1.msra.mxu0 0.0
  %1072 = vmatprep.subr.mxu0 0.0
  %1073 = vmatpush1.msra.mxu0 0.0
  %1074 = vmatprep.subr.mxu0 0.0
  %1075 = vmatpush1.msra.mxu0 0.0
  %1076 = vmatprep.subr.mxu0 0.0
  %1077 = vmatpush1.msra.mxu0 0.0
  %1078 = vmatprep.subr.mxu0 0.0
  %1079 = vmatpush1.msra.mxu0 0.0
  %1080 = vmatprep.subr.mxu0 0.0
  %1081 = vmatpush1.msra.mxu0 0.0
  %1082 = vmatprep.subr.mxu0 0.0
  %1083 = vmatpush1.msra.mxu0 0.0
  %1084 = vmatprep.subr.mxu0 0.0
  %1085 = vmatpush1.msra.mxu0 0.0
  %1086 = vmatprep.subr.mxu0 0.0
  %1087 = vmatpush1.msra.mxu0 0.0
  %1088 = vmatprep.subr.mxu0 0.0
  %1089 = vmatpush1.msra.mxu0 0.0
  %1090 = vmatprep.subr.mxu0 0.0
  %1091 = vmatpush1.msra.mxu0 0.0
  %1092 = vmatprep.subr.mxu0 0.0
  %1093 = vmatpush1.msra.mxu0 0.0
  %1094 = vmatprep.subr.mxu0 0.0
  %1095 = vmatpush1.msra.mxu0 0.0
  %1096 = vmatprep.subr.mxu0 0.0
  %1097 = vmatpush1.msra.mxu0 0.0
  %1098 = vmatprep.subr.mxu0 0.0
  %1099 = vmatpush1.msra.mxu0 0.0
  %1100 = vmatprep.subr.mxu0 0.0
  %1101 = vmatpush1.msra.mxu0 0.0
  %1102 = vmatprep.subr.mxu0 0.0
  %1103 = vmatpush1.msra.mxu0 0.0
  %1104 = vmatprep.subr.mxu0 0.0
  %1105 = vmatpush1.msra.mxu0 0.0
  %1106 = vmatprep.mubr.f32.mxu0 0.0
  %1107 = vmatmul.mubr.f32.gmra.mrb[0].mxu0 %v1040
  %v1108 = vpop.f32.mrb[0].mxu0
  %v1109 = vadd.f32 %v1036, %v1108
  %v1110 = vpop.f32.mrb[0].mxu0
  %1111 = vdwg.mxu0
  %v1112 = vld [vmem:[%s5] sm:$0x1]
  %v1114 = vlaneseq
  %v1115 = vshrl.u32 %v1114, 7
  %v1116 = vsub.s32 0, %v1115
  %v1117 = vrot.slane %v1112, %v1116
  %v1119 = vadd.f32 %v1109, %v1117
  %vm1120 = vcmask 15360
  %v1121 = vsel %vm1120, %v1119, -inf
  %1122 = vmax.xlane.f32.xlu0 %v1121
  %v1123 = vpop.xlane.xlu0 %1122
  %v1124 = vsub.f32 %v1119, %v1123
  %v1125 = vmul.f32 %v1124, 1.442695
  %v1126 = vpow.pop %v1125
  %v1127 = vsel %vm1120, %v1126, 0.0
  %1128 = vadd.xlane.f32.xlu0 %v1127
  %v1129 = vpop.xlane.xlu0 %1128
  %v1130 = vlog2.pop %v1129
  %v1131 = vmul.f32 %v1130, 0.6931472
  %v1132 = vsub.f32 %v1124, %v1131
  %1133 = vst.msk [vmem:[%s6] sm:$0xff] %vm1120, %v1132
  // Predicated region
  $region26: #{qa_rnn_forward.1} parent=0 // pred_check
    _
  $region27: #{qa_rnn_forward.1} parent=0 // pred_check_branch
    %1135 = sbr.rel (0) target = $region29
  $region28: #{qa_rnn_forward.1} parent=0 // pred_region
    _
  $region29: #{qa_rnn_forward.1} parent=0 // pred_fallthru
    _
  // Predicated region
  $region30: #{qa_rnn_forward.1} parent=0 // pred_check
    _
  $region31: #{qa_rnn_forward.1} parent=0 // pred_check_branch
    %1137 = sbr.rel (0) target = $region33
  $region32: #{qa_rnn_forward.1} parent=0 // pred_region
    _
  $region33: #{qa_rnn_forward.1} parent=0 // pred_fallthru
    _

</llo_original>
